<compile_context>
chip_gen: v7x
topology: tpu7x:2x2x1
jax: 0.10.0
libtpu: 0.0.40
codegen_flags: <defaults>
</compile_context>

<pallas_src>
import functools

import jax
import jax.numpy as jnp
from jax.experimental import pallas as pl
from jax.experimental.pallas import tpu as pltpu

LANE = 128
_SUBLANE = 8


def _num_tensorcores():
    """Best-effort TensorCores-per-chip (2 on megacore chips: v4/v5p/v7x)."""
    try:
        info = pltpu.get_tpu_info()
        for attr in ("num_cores", "num_tensorcores", "tensorcore_count",
                     "num_cores_per_chip", "core_count"):
            n = getattr(info, attr, None)
            if n is not None:
                n = int(n)
                if 1 <= n <= 8:
                    return min(n, 2)
    except Exception:
        pass
    try:
        kind = jax.devices()[0].device_kind.lower()
        if "lite" in kind or "v5e" in kind or "v6" in kind:
            return 1  # single-TensorCore chips
        if any(t in kind for t in ("v4", "v5p", "v5", "7x", "v7")):
            return 2  # megacore chips (2 TensorCores / chip)
    except Exception:
        pass
    return 1


def _bce_mean_kernel(x_ref, y_ref, o_ref, *, valid_rows, tile_rows, need_mask,
                     binary_targets):
    c = pl.program_id(0)  # core-parallel axis (megacore); sequential otherwise
    i = pl.program_id(1)  # sequential reduction axis over row tiles

    @pl.when(i == 0)
    def _():
        o_ref[...] = jnp.zeros_like(o_ref)

    pt = x_ref[...].astype(jnp.float32)
    y = y_ref[...].astype(jnp.float32)
    if binary_targets:
        # One EUP log per element; bit-exact for y in {0, 1}.
        loss = -jnp.log(jnp.where(y >= 0.5, pt, 1.0 - pt))
    else:
        # Exactly the module's math: loss = -(y*log(pt) + (1-y)*log(1-pt))
        loss = -(y * jnp.log(pt) + (1.0 - y) * jnp.log(1.0 - pt))

    def fold(v):
        # Pure VPU accumulation of (tile_rows, 128) into the resident (8, 128)
        # per-core partial; the single cross-lane reduce happens outside.
        return v.reshape(tile_rows // _SUBLANE, _SUBLANE, LANE).sum(axis=0)

    if need_mask:
        # Un-clamped global tile index. Tiles below `first_bad` are fully valid
        # and skip the mask entirely (pl.when split keeps them iota/select-free).
        t = c * pl.num_programs(1) + i
        first_bad = valid_rows // tile_rows

        @pl.when(t < first_bad)
        def _():
            o_ref[0] += fold(loss)

        @pl.when(t >= first_bad)
        def _():
            # Row-index-only compare (no element-index int32 overflow hazard).
            # Zeroes the OOB rows of the edge block and entire duplicated
            # clamped tiles on the parallel axis; select scrubs NaN/Inf garbage.
            row = (jax.lax.broadcasted_iota(jnp.int32, loss.shape, 0)
                   + t * tile_rows)
            o_ref[0] += fold(jnp.where(row < valid_rows, loss, 0.0))
    else:
        o_ref[0] += fold(loss)


def bce_focal_loss(_input, target, *, tile_rows=8192, binary_targets=False):
    """Pallas equivalent of BCEFocalLoss(reduction='elementwise_mean').forward.

    Set binary_targets=True only when target is exactly {0, 1}; the math is
    then bit-identical but uses one log per element instead of two.
    """
    assert _input.shape == target.shape
    total_elems = _input.size

    # Flatten (free for contiguous arrays); dtype cast stays inside the kernel
    # so HBM traffic is exactly N * input-dtype bytes.
    flat_x = _input.reshape(-1)
    flat_y = target.reshape(-1)

    rem = total_elems % LANE
    aligned = total_elems - rem
    if rem:
        # Ragged tail (<128 elements): reduce it with a tiny jnp expression
        # instead of jnp.pad-copying both full tensors (~3x HBM traffic).
        tx = flat_x[aligned:].astype(jnp.float32)
        ty = flat_y[aligned:].astype(jnp.float32)
        tail_sum = jnp.sum(-(ty * jnp.log(tx) + (1.0 - ty) * jnp.log(1.0 - tx)))
        if aligned == 0:
            # Fewer than 128 elements total: not worth a kernel launch.
            return tail_sum / jnp.float32(total_elems)
        # TODO(synk): this prefix slice may still materialize a copy in eager
        # mode; acceptable for the rare non-128-aligned case (typical NCHW
        # tensors take the zero-copy path below).
        flat_x = flat_x[:aligned]
        flat_y = flat_y[:aligned]
    else:
        tail_sum = jnp.float32(0.0)

    rows = aligned // LANE
    x2d = flat_x.reshape(rows, LANE)
    y2d = flat_y.reshape(rows, LANE)

    x_item = jnp.dtype(_input.dtype).itemsize
    y_item = jnp.dtype(target.dtype).itemsize

    # Round the row tile to the packed-sublane multiple of the narrowest input
    # dtype (8 f32, 16 bf16, 32 int8/fp8) and clamp to the data size.
    sub_mult = _SUBLANE * max(4 // min(x_item, y_item), 1)
    tr = min(int(tile_rows), pl.cdiv(rows, sub_mult) * sub_mult)
    tr = max((tr // sub_mult) * sub_mult, sub_mult)
    n_tiles = pl.cdiv(rows, tr)

    # Per-core partials only where a second TensorCore exists (v4/v5p/v7x);
    # single-core v5e/v6e get a 1-core grid with no duplicated clamped tiles.
    # TODO(synk): verify in xprof that "parallel" actually shards this axis
    # across v7x's two TensorCores; switch to pltpu.CORE_PARALLEL if it doesn't.
    ncores = min(_num_tensorcores(), n_tiles) if n_tiles >= 2 else 1
    tiles_per_core = pl.cdiv(n_tiles, ncores)

    # Mask only if the grid's row coverage exceeds the real row count (ragged
    # edge block and/or duplicated clamped tiles on the parallel axis).
    need_mask = (ncores * tiles_per_core * tr) != rows

    def tile_map(c, i):
        # Clamp so an over-provisioned grid point never DMAs a fully
        # out-of-bounds block; its contribution is masked to zero in-kernel.
        return (jnp.minimum(c * tiles_per_core + i, n_tiles - 1), 0)

    kernel = functools.partial(
        _bce_mean_kernel,
        valid_rows=rows,
        tile_rows=tr,
        need_mask=need_mask,
        binary_targets=binary_targets,
    )

    # 2 inputs x 2 pipeline buffers of (tr, 128) blocks, plus headroom. Sized
    # explicitly so v5e's 16 MiB default scoped VMEM is not a limit and v7x's
    # 64 MiB physical VMEM is never approached.
    block_bytes = tr * LANE * (x_item + y_item)
    vmem_limit = max(16 << 20, min(2 * block_bytes + (4 << 20), 48 << 20))

    cost = pl.CostEstimate(
        flops=5 * total_elems,
        transcendentals=(1 if binary_targets else 2) * total_elems,
        bytes_accessed=(x_item + y_item) * total_elems
        + ncores * _SUBLANE * LANE * 4,
    )

    partials = pl.pallas_call(
        kernel,
        out_shape=jax.ShapeDtypeStruct((ncores, _SUBLANE, LANE), jnp.float32),
        grid_spec=pltpu.PrefetchScalarGridSpec(
            num_scalar_prefetch=0,
            grid=(ncores, tiles_per_core),
            in_specs=[
                pl.BlockSpec((tr, LANE), tile_map),
                pl.BlockSpec((tr, LANE), tile_map),
            ],
            out_specs=pl.BlockSpec((1, _SUBLANE, LANE), lambda c, i: (c, 0, 0)),
        ),
        compiler_params=pltpu.CompilerParams(
            dimension_semantics=("parallel", "arbitrary"),
            vmem_limit_bytes=int(vmem_limit),
        ),
        cost_estimate=cost,
    )(x2d, y2d)

    # Single tiny cross-lane reduce + mean, outside the streaming kernel.
    return (jnp.sum(partials) + tail_sum) / jnp.float32(total_elems)


def _reference(x, y):
    x = x.astype(jnp.float32)
    y = y.astype(jnp.float32)
    return jnp.mean(-(y * jnp.log(x) + (1.0 - y) * jnp.log(1.0 - x)))


if __name__ == "__main__":
    key = jax.random.PRNGKey(0)
    k1, k2, k3, k4 = jax.random.split(key, 4)

    # NCHW probabilities / binary targets, as produced by a sigmoid head.
    shape = (2, 4, 16, 16)
    _input = jax.random.uniform(k1, shape, jnp.float32, minval=0.05, maxval=0.95)
    target = jax.random.bernoulli(k2, 0.5, shape).astype(jnp.float32)
    ref = _reference(_input, target)

    # 1) Default config (single big tile, zero-copy, no masking path).
    loss = jax.block_until_ready(bce_focal_loss(_input, target))
    assert jnp.allclose(loss, ref, rtol=1e-5, atol=1e-6), (loss, ref)

    # 2) Force the multi-tile grid path with small tiles (exact coverage).
    loss2 = jax.block_until_ready(bce_focal_loss(_input, target, tile_rows=8))
    assert jnp.allclose(loss2, ref, rtol=1e-5, atol=1e-6), (loss2, ref)

    # 3) Single-log fast path for {0,1} targets (matches the two-log form).
    loss3 = jax.block_until_ready(
        bce_focal_loss(_input, target, binary_targets=True))
    assert jnp.allclose(loss3, ref, rtol=1e-5, atol=1e-6), (loss3, ref)

    # 4) Truly ragged size (2016 = 15*128 + 96): exercises the jnp tail path,
    #    the partial edge block, and the in-kernel row mask.
    shape4 = (2, 3, 16, 21)
    x4 = jax.random.uniform(k3, shape4, jnp.float32, minval=0.05, maxval=0.95)
    y4 = jax.random.bernoulli(k4, 0.5, shape4).astype(jnp.float32)
    loss4 = jax.block_until_ready(bce_focal_loss(x4, y4, tile_rows=8))
    ref4 = _reference(x4, y4)
    assert jnp.allclose(loss4, ref4, rtol=1e-5, atol=1e-6), (loss4, ref4)

    print("KERNEL_OK")
</pallas_src>

<mosaic_0001>
module attributes {stable_mosaic.version = 11 : i64} {
  func.func @_bce_mean_kernel(%arg0: i32, %arg1: i32, %arg2: memref<16x128xf32, #tpu.memory_space<vmem>>, %arg3: memref<16x128xf32, #tpu.memory_space<vmem>>, %arg4: memref<1x8x128xf32, #tpu.memory_space<vmem>>) attributes {dimension_semantics = [#tpu.dimension_semantics<parallel>, #tpu.dimension_semantics<arbitrary>], iteration_bounds = array<i64: 1, 1>, scalar_prefetch = 0 : i64, scratch_operands = 0 : i64, tpu.core_type = #tpu.core_type<tc>, window_params = [{transform_indices = @transform_0, window_bounds = array<i64: 16, 128>}, {transform_indices = @transform_1, window_bounds = array<i64: 16, 128>}, {transform_indices = @transform_2, window_bounds = array<i64: 1, 8, 128>}]} {
    %c0_i32 = arith.constant 0 : i32
    %0 = arith.cmpi eq, %arg1, %c0_i32 : i32
    %1 = arith.extui %0 : i1 to i32
    %c0_i32_0 = arith.constant 0 : i32
    %2 = arith.cmpi ne, %1, %c0_i32_0 : i32
    scf.if %2 {
      %cst_13 = arith.constant 0.000000e+00 : f32
      %24 = vector.broadcast %cst_13 : f32 to vector<1x8x128xf32>
      %c0_14 = arith.constant 0 : index
      %c0_15 = arith.constant 0 : index
      %c0_16 = arith.constant 0 : index
      %25 = vector.load %arg4[%c0_14, %c0_15, %c0_16] : memref<1x8x128xf32, #tpu.memory_space<vmem>>, vector<1x8x128xf32>
      tpu.vector_store %arg4[%c0_14, %c0_15, %c0_16], %24 {strides = array<i32>} : memref<1x8x128xf32, #tpu.memory_space<vmem>>, vector<1x8x128xf32>,
    } else {
    }
    %c0 = arith.constant 0 : index
    %c0_1 = arith.constant 0 : index
    %3 = vector.load %arg2[%c0, %c0_1] : memref<16x128xf32, #tpu.memory_space<vmem>>, vector<16x128xf32>
    %c0_2 = arith.constant 0 : index
    %c0_3 = arith.constant 0 : index
    %4 = vector.load %arg3[%c0_2, %c0_3] : memref<16x128xf32, #tpu.memory_space<vmem>>, vector<16x128xf32>
    %5 = math.log %3 : vector<16x128xf32>
    %6 = arith.mulf %4, %5 : vector<16x128xf32>
    %cst = arith.constant 1.000000e+00 : f32
    %7 = vector.broadcast %cst : f32 to vector<16x128xf32>
    %8 = arith.subf %7, %4 : vector<16x128xf32>
    %cst_4 = arith.constant 1.000000e+00 : f32
    %9 = vector.broadcast %cst_4 : f32 to vector<16x128xf32>
    %10 = arith.subf %9, %3 : vector<16x128xf32>
    %11 = math.log %10 : vector<16x128xf32>
    %12 = arith.mulf %8, %11 : vector<16x128xf32>
    %13 = arith.addf %6, %12 : vector<16x128xf32>
    %cst_5 = arith.constant 0.000000e+00 : f32
    %14 = vector.broadcast %cst_5 : f32 to vector<16x128xf32>
    %15 = arith.subf %14, %13 : vector<16x128xf32>
    %c0_6 = arith.constant 0 : index
    %c0_7 = arith.constant 0 : index
    %c0_8 = arith.constant 0 : index
    %16 = vector.load %arg4[%c0_6, %c0_7, %c0_8] : memref<1x8x128xf32, #tpu.memory_space<vmem>>, vector<1x8x128xf32>
    %17 = vector.shape_cast %16 : vector<1x8x128xf32> to vector<8x128xf32>
    %18 = vector.shape_cast %15 : vector<16x128xf32> to vector<2x8x128xf32>
    %cst_9 = arith.constant dense<0.000000e+00> : vector<8x128xf32>
    %19 = vector.multi_reduction <add>, %18, %cst_9 [0] : vector<2x8x128xf32> to vector<8x128xf32>
    %20 = arith.addf %17, %19 : vector<8x128xf32>
    %c0_10 = arith.constant 0 : index
    %c0_11 = arith.constant 0 : index
    %c0_12 = arith.constant 0 : index
    %21 = vector.load %arg4[%c0_10, %c0_11, %c0_12] : memref<1x8x128xf32, #tpu.memory_space<vmem>>, vector<1x8x128xf32>
    %22 = vector.shape_cast %21 : vector<1x8x128xf32> to vector<8x128xf32>
    %23 = vector.shape_cast %20 : vector<8x128xf32> to vector<1x8x128xf32>
    tpu.vector_store %arg4[%c0_10, %c0_11, %c0_12], %23 {strides = array<i32>} : memref<1x8x128xf32, #tpu.memory_space<vmem>>, vector<1x8x128xf32>,
    return
  }
  func.func @transform_0(%arg0: i32, %arg1: i32) -> (i32, i32) {
    %c1_i32 = arith.constant 1 : i32
    %0 = arith.muli %arg0, %c1_i32 : i32
    %1 = arith.addi %0, %arg1 : i32
    %c0_i32 = arith.constant 0 : i32
    %2 = arith.minsi %1, %c0_i32 : i32
    %c0_i32_0 = arith.constant 0 : i32
    %c0_i32_1 = arith.constant 0 : i32
    return %2, %c0_i32_0 : i32, i32
  }
  func.func @transform_1(%arg0: i32, %arg1: i32) -> (i32, i32) {
    %c1_i32 = arith.constant 1 : i32
    %0 = arith.muli %arg0, %c1_i32 : i32
    %1 = arith.addi %0, %arg1 : i32
    %c0_i32 = arith.constant 0 : i32
    %2 = arith.minsi %1, %c0_i32 : i32
    %c0_i32_0 = arith.constant 0 : i32
    %c0_i32_1 = arith.constant 0 : i32
    return %2, %c0_i32_0 : i32, i32
  }
  func.func @transform_2(%arg0: i32, %arg1: i32) -> (i32, i32, i32) {
    %c0_i32 = arith.constant 0 : i32
    %c0_i32_0 = arith.constant 0 : i32
    %c0_i32_1 = arith.constant 0 : i32
    return %arg0, %c0_i32, %c0_i32_0 : i32, i32, i32
  }
}

</mosaic_0001>

<llo_original>
// kernel: tpu_custom_call.1
$region0: #{tpu_custom_call.1}
  #allocation0 [shape = 'u32[]', space=smem, size = 0x4, offset = 0x4, fixed_abs, tag = 'smem constant byte address 0x4 - core index']
  #allocation1 [shape = 'u32[144,128]{1,0:T(1,128)}', space=vmem, size = 0x12000, scoped, tag = 'internal scratch']
  %s0 = inlined_call_operand.hbm [shape: f32[16,128], index: 0, kind: input, shape index: {}]
  %s1 = inlined_call_operand.hbm [shape: f32[16,128], index: 1, kind: input, shape index: {}]
  %s2 = inlined_call_operand.hbm [shape: f32[1,8,128], index: 2, kind: output, shape index: {}]
  %s3 = sld [smem:[#allocation0]]
  $region30: #{tpu_custom_call.1} parent=0
    _
  %s5 = ssub.s32 1, %s3
  %s6 = scalar_select 0, %s5, %s3
  $region1: #{tpu_custom_call.1} parent=0
    #allocation2 [shape = 'u8[8192]{0}', space=vmem, size = 0x2000, scoped, tag = 'input window, operand 0, single buffered']
    #allocation3 [shape = 's32[1]{0}', space=sflag, size = 0x4, scoped, tag = 'scoped memory for tpu_custom_call.1']
    #allocation4 [shape = 's32[1]{0}', space=sflag, size = 0x4, scoped, tag = 'scoped memory for tpu_custom_call.1']
    #allocation5 [shape = 'u8[8192]{0}', space=vmem, size = 0x2000, scoped, tag = 'input window, operand 1, single buffered']
    #allocation6 [shape = 's32[1]{0}', space=sflag, size = 0x4, scoped, tag = 'scoped memory for tpu_custom_call.1']
    #allocation7 [shape = 'u8[4096]{0}', space=vmem, size = 0x1000, scoped, tag = 'output window, operand 0, single buffered']
    %7 = vsyncpa [#allocation3], 0
    %8 = vsyncpa [#allocation6], 0
    %9 = vsyncpa [#allocation4], 0
    // Predicated region
    $region2: #{tpu_custom_call.1} parent=1 // pred_check
      _
    $region3: #{tpu_custom_call.1} parent=1 // pred_check_branch
      %11 = sbr.rel (0) target = $region5
    $region4: #{tpu_custom_call.1} parent=1 // pred_region
      %s12 = sadd.s32 0, 0
      %p13 = scmp.lt.s32.totalorder %s12, 0
      %s14 = scalar_select %p13, %s12, 0
      %s15 = smul.u32 2, %s14
      %s17 = ssub.s32 256, 256
      %18 = vsyncadd [#allocation3], %s17
      %s19 = smul.addr %s15, 128
      %s20 = scalar_lea.hbm %s0, %s19
      %s21 = sshll.u32 [#allocation2], 4
      %s22 = int_to_ptr.vmem [resolvable:$true] %s21
      %27 = dma.hbm_to_vmem [thread:$0]  %s20, 256, %s22, [#allocation3], 128, 128, 8
    $region5: #{tpu_custom_call.1} parent=1 // pred_fallthru
      _
    // Predicated region
    $region6: #{tpu_custom_call.1} parent=1 // pred_check
      _
    $region7: #{tpu_custom_call.1} parent=1 // pred_check_branch
      %29 = sbr.rel (0) target = $region9
    $region8: #{tpu_custom_call.1} parent=1 // pred_region
      %s30 = sadd.s32 0, 0
      %p31 = scmp.lt.s32.totalorder %s30, 0
      %s32 = scalar_select %p31, %s30, 0
      %s33 = smul.u32 2, %s32
      %s35 = ssub.s32 256, 256
      %36 = vsyncadd [#allocation6], %s35
      %s37 = smul.addr %s33, 128
      %s38 = scalar_lea.hbm %s1, %s37
      %s39 = sshll.u32 [#allocation5], 4
      %s40 = int_to_ptr.vmem [resolvable:$true] %s39
      %45 = dma.hbm_to_vmem [thread:$0]  %s38, 256, %s40, [#allocation6], 128, 128, 8
    $region9: #{tpu_custom_call.1} parent=1 // pred_fallthru
      _
    // Predicated region
    $region10: #{tpu_custom_call.1} parent=1 // pred_check
      _
    $region11: #{tpu_custom_call.1} parent=1 // pred_check_branch
      %47 = sbr.rel (0) target = $region13
    $region12: #{tpu_custom_call.1} parent=1 // pred_region
      %48 = dma.done [#allocation3], 256
    $region13: #{tpu_custom_call.1} parent=1 // pred_fallthru
      _
    // Predicated region
    $region14: #{tpu_custom_call.1} parent=1 // pred_check
      _
    $region15: #{tpu_custom_call.1} parent=1 // pred_check_branch
      %50 = sbr.rel (0) target = $region17
    $region16: #{tpu_custom_call.1} parent=1 // pred_region
      %51 = dma.done [#allocation6], 256
    $region17: #{tpu_custom_call.1} parent=1 // pred_fallthru
      _
    %s52 = sadd.s32 0, 0
    %p53 = scmp.lt.s32.totalorder %s52, 0
    %s54 = scalar_select %p53, %s52, 0
    %s55 = smul.u32 2, %s54
    %s56 = sadd.s32 0, 0
    %p57 = scmp.lt.s32.totalorder %s56, 0
    %s58 = scalar_select %p57, %s56, 0
    %s59 = smul.u32 2, %s58
    %p60 = scmp.eq.s32.totalorder 0, 0
    // Predicated region
    $region18: #{tpu_custom_call.1} parent=1 // pred_check
      %p61 = pneg %p60
    $region19: #{tpu_custom_call.1} parent=1 // pred_check_branch
      %63 = sbr.rel (%p61) target = $region21
    $region20: #{tpu_custom_call.1} parent=1 // pred_region
      %64 = vst [vmem:[#allocation7] sm:$0xff] 0.0
    $region21: #{tpu_custom_call.1} parent=1 // pred_fallthru
      _
    %v65 = vld [vmem:[#allocation2] sm:$0xff]
    %v66 = vld [vmem:[#allocation2 + $0x8] sm:$0xff]
    %v67 = vld [vmem:[#allocation5] sm:$0xff]
    %v68 = vld [vmem:[#allocation5 + $0x8] sm:$0xff]
    %v69 = vlog2.pop %v65
    %v70 = vmul.f32 %v69, 0.6931472
    %v71 = vlog2.pop %v66
    %v72 = vmul.f32 %v71, 0.6931472
    %v73 = vmul.f32 %v67, %v70
    %v74 = vmul.f32 %v68, %v72
    %v75 = vsub.f32 1.0, %v67
    %v76 = vsub.f32 1.0, %v68
    %v77 = vsub.f32 1.0, %v65
    %v78 = vsub.f32 1.0, %v66
    %v79 = vlog2.pop %v77
    %v80 = vmul.f32 %v79, 0.6931472
    %v81 = vlog2.pop %v78
    %v82 = vmul.f32 %v81, 0.6931472
    %v83 = vmul.f32 %v75, %v80
    %v84 = vmul.f32 %v76, %v82
    %v85 = vadd.f32 %v73, %v83
    %v86 = vadd.f32 %v74, %v84
    %v87 = vsub.f32 0.0, %v85
    %v88 = vsub.f32 0.0, %v86
    %v89 = vld [vmem:[#allocation7] sm:$0xff]
    %v90 = vadd.f32 %v87, %v88
    %v91 = vadd.f32 %v89, %v90
    %92 = vst [vmem:[#allocation7] sm:$0xff] %v91
    // Predicated region
    $region22: #{tpu_custom_call.1} parent=1 // pred_check
      _
    $region23: #{tpu_custom_call.1} parent=1 // pred_check_branch
      %94 = sbr.rel (0) target = $region25
    $region24: #{tpu_custom_call.1} parent=1 // pred_region
      %s96 = ssub.s32 128, 128
      %97 = vsyncadd [#allocation4], %s96
      %s99 = sshll.u32 [#allocation7], 4
      %s100 = int_to_ptr.vmem [resolvable:$true] %s99
      %102 = dma.vmem_to_hbm [thread:$0]  %s100, 128, %s2, [#allocation4]
    $region25: #{tpu_custom_call.1} parent=1 // pred_fallthru
      _
    // Predicated region
    $region26: #{tpu_custom_call.1} parent=1 // pred_check
      _
    $region27: #{tpu_custom_call.1} parent=1 // pred_check_branch
      %104 = sbr.rel (0) target = $region29
    $region28: #{tpu_custom_call.1} parent=1 // pred_region
      %105 = dma.done [#allocation4], 128
    $region29: #{tpu_custom_call.1} parent=1 // pred_fallthru
      _
    %106 = vsyncpa [#allocation3], 1
    %107 = vsyncpa [#allocation6], 1
    %108 = vsyncpa [#allocation4], 1

</llo_original>
